<compile_context>
chip_gen: v7x
topology: tpu7x:2x2x1
jax: 0.10.0
libtpu: 0.0.40
codegen_flags: <defaults>
</compile_context>

<pallas_src>
import functools
import jax
import jax.numpy as jnp
from jax.experimental import pallas as pl
from jax.experimental.pallas import tpu as pltpu


def _round_up(x, m):
    return ((x + m - 1) // m) * m


# ----------------------------------------------------------------------------
# Kernels
# ----------------------------------------------------------------------------
def _mlp_kernel_single(x_ref, w1_ref, b1_ref, w2_ref, b2_ref, o_ref):
    """Single H-chunk fast path: whole hidden dim in VMEM, no scratch."""
    # x_ref : (tm, Cp) bf16     w1_ref: (Cp, 2*H) bf16 packed [val | gate]
    # b1_ref: (1, 2*H) f32      w2_ref: (H, Cp)  bf16    b2_ref: (1, Cp) f32
    th = w2_ref.shape[0]
    x = x_ref[...]
    h = jnp.dot(x, w1_ref[...], preferred_element_type=jnp.float32) + b1_ref[...]
    val, gate = h[:, :th], h[:, th:]
    act = val * (gate * jax.nn.sigmoid(gate))          # SwiGLU in f32
    out = jnp.dot(act.astype(w2_ref.dtype), w2_ref[...],
                  preferred_element_type=jnp.float32) + b2_ref[...]
    o_ref[...] = out.astype(o_ref.dtype)


def _mlp_kernel_multi(x_ref, w1_ref, b1_ref, w2_ref, b2_ref, o_ref, acc_ref):
    """H tiled into chunks; f32 accumulator resident across the H axis."""
    j = pl.program_id(1)
    th = w2_ref.shape[0]

    @pl.when(j == 0)
    def _():
        acc_ref[...] = jnp.zeros_like(acc_ref)

    x = x_ref[...]
    h = jnp.dot(x, w1_ref[...], preferred_element_type=jnp.float32) + b1_ref[...]
    val, gate = h[:, :th], h[:, th:]
    act = val * (gate * jax.nn.sigmoid(gate))
    acc_ref[...] += jnp.dot(act.astype(w2_ref.dtype), w2_ref[...],
                            preferred_element_type=jnp.float32)

    @pl.when(j == pl.num_programs(1) - 1)
    def _():
        # b2 added exactly once, in the finalize step.
        o_ref[...] = (acc_ref[...] + b2_ref[...]).astype(o_ref.dtype)


# ----------------------------------------------------------------------------
# Wrapper
# ----------------------------------------------------------------------------
@functools.partial(jax.jit, static_argnames=("tm", "th", "matmul_dtype"))
def mlp_forward(x, w1, b1, w2, b2, *, tm=256, th=None,
                matmul_dtype=jnp.bfloat16):
    """x: (B, T, C). w1: (C, 2H), b1: (2H,), w2: (H, C), b2: (C,)."""
    B, T, C = x.shape
    M = B * T
    H = w1.shape[1] // 2
    assert w1.shape == (C, 2 * H) and w2.shape == (H, C)
    assert b1.shape == (2 * H,) and b2.shape == (C,)

    # SwiGLU: h.chunk(2, -1) -> (value, gate); value = first half of W1 cols.
    w1_val, w1_gate = w1[:, :H], w1[:, H:]
    b1_val, b1_gate = b1[:H], b1[H:]

    xd = matmul_dtype
    f32 = jnp.float32
    bpe = jnp.dtype(xd).itemsize
    out_bpe = jnp.dtype(x.dtype).itemsize

    # ---- lane/sublane friendly padded sizes --------------------------------
    Cp = _round_up(C, 128)
    tm_eff = max(8, min(tm, _round_up(M, 8)))
    Mp = _round_up(M, tm_eff)
    Hp128 = _round_up(H, 128)

    # Pick the H-chunk width: keep all weights resident if they fit a modest
    # VMEM budget (weights then stream from HBM exactly once); otherwise chunk.
    if th is None:
        weight_bytes = (2 * Cp * Hp128 + Hp128 * Cp) * bpe
        th = Hp128 if weight_bytes <= (24 << 20) else 1024
    th_eff = min(_round_up(th, 128), Hp128)
    Hp = _round_up(H, th_eff)
    n_h = Hp // th_eff

    # ---- pad / pack operands (only when needed) -----------------------------
    def pad2(a, rows, cols, dtype):
        a = a.astype(dtype)
        if a.shape == (rows, cols):
            return a
        return jnp.zeros((rows, cols), dtype).at[:a.shape[0], :a.shape[1]].set(a)

    x2 = x.reshape(M, C)
    x_p = pad2(x2, Mp, Cp, xd)

    w1v_p = pad2(w1_val, Cp, Hp, xd)
    w1g_p = pad2(w1_gate, Cp, Hp, xd)
    # Interleave value/gate per H chunk -> each (Cp, 2*th) block is [val|gate].
    w1_packed = jnp.stack(
        [w1v_p.reshape(Cp, n_h, th_eff), w1g_p.reshape(Cp, n_h, th_eff)],
        axis=2).reshape(Cp, 2 * Hp)

    b1v_p = pad2(b1_val.reshape(1, H), 1, Hp, f32)
    b1g_p = pad2(b1_gate.reshape(1, H), 1, Hp, f32)
    b1_packed = jnp.stack(
        [b1v_p.reshape(1, n_h, th_eff), b1g_p.reshape(1, n_h, th_eff)],
        axis=2).reshape(1, 2 * Hp)

    w2_p = pad2(w2, Hp, Cp, xd)
    b2_p = pad2(b2.reshape(1, C), 1, Cp, f32)

    # ---- explicit VMEM budget from the tile plan ----------------------------
    tile_bytes = (
        2 * tm_eff * Cp * bpe                     # x tile (double buffered)
        + 2 * Cp * (2 * th_eff) * bpe             # packed W1 chunk
        + 2 * (2 * th_eff) * 4                    # packed b1 chunk
        + 2 * th_eff * Cp * bpe                   # W2 chunk
        + 2 * Cp * 4                              # b2
        + 2 * tm_eff * Cp * out_bpe               # output tile
        + (tm_eff * Cp * 4 if n_h > 1 else 0)     # f32 accumulator scratch
        + tm_eff * (2 * th_eff) * 4               # h intermediate (f32)
        + tm_eff * th_eff * (4 + bpe)             # act intermediates
    )
    # Clamp so the plan stays inside every generation's physical VMEM
    # (v7x has 64 MiB per TensorCore).
    vmem_limit = int(min(max(2 * tile_bytes, 32 << 20), 64 << 20))

    flops = 6 * Mp * Cp * Hp                      # both projections
    bytes_accessed = (Mp * Cp * (bpe + out_bpe)
                      + (2 * Cp * Hp + Hp * Cp) * bpe * (Mp // tm_eff if n_h > 1 else 1))
    cost = pl.CostEstimate(flops=flops, transcendentals=Mp * Hp,
                           bytes_accessed=bytes_accessed)

    out_shape = jax.ShapeDtypeStruct((Mp, Cp), x.dtype)

    if n_h == 1:
        # Fast path: 1-D grid over row tiles; weights resident across the grid.
        out_p = pl.pallas_call(
            _mlp_kernel_single,
            out_shape=out_shape,
            grid_spec=pltpu.PrefetchScalarGridSpec(
                num_scalar_prefetch=0,
                grid=(Mp // tm_eff,),
                in_specs=[
                    pl.BlockSpec((tm_eff, Cp), lambda i: (i, 0)),       # x
                    pl.BlockSpec((Cp, 2 * th_eff), lambda i: (0, 0)),   # W1 packed
                    pl.BlockSpec((1, 2 * th_eff), lambda i: (0, 0)),    # b1 packed
                    pl.BlockSpec((th_eff, Cp), lambda i: (0, 0)),       # W2
                    pl.BlockSpec((1, Cp), lambda i: (0, 0)),            # b2
                ],
                out_specs=pl.BlockSpec((tm_eff, Cp), lambda i: (i, 0)),
            ),
            compiler_params=pltpu.CompilerParams(
                dimension_semantics=("parallel",),
                vmem_limit_bytes=vmem_limit,
            ),
            cost_estimate=cost,
        )(x_p, w1_packed, b1_packed, w2_p, b2_p)
    else:
        out_p = pl.pallas_call(
            _mlp_kernel_multi,
            out_shape=out_shape,
            grid_spec=pltpu.PrefetchScalarGridSpec(
                num_scalar_prefetch=0,
                grid=(Mp // tm_eff, n_h),
                in_specs=[
                    pl.BlockSpec((tm_eff, Cp), lambda i, j: (i, 0)),      # x
                    pl.BlockSpec((Cp, 2 * th_eff), lambda i, j: (0, j)),  # W1 packed
                    pl.BlockSpec((1, 2 * th_eff), lambda i, j: (0, j)),   # b1 packed
                    pl.BlockSpec((th_eff, Cp), lambda i, j: (j, 0)),      # W2 chunk
                    pl.BlockSpec((1, Cp), lambda i, j: (0, 0)),           # b2
                ],
                out_specs=pl.BlockSpec((tm_eff, Cp), lambda i, j: (i, 0)),
                scratch_shapes=[pltpu.VMEM((tm_eff, Cp), jnp.float32)],
            ),
            compiler_params=pltpu.CompilerParams(
                dimension_semantics=("parallel", "arbitrary"),
                vmem_limit_bytes=vmem_limit,
            ),
            cost_estimate=cost,
        )(x_p, w1_packed, b1_packed, w2_p, b2_p)

    return out_p[:M, :C].reshape(B, T, C)


# ----------------------------------------------------------------------------
# Reference + tests
# ----------------------------------------------------------------------------
def reference_forward(x, w1, b1, w2, b2, matmul_dtype=jnp.bfloat16):
    """Reference with identical bf16 matmul operands / f32 accumulation."""
    B, T, C = x.shape
    H = w1.shape[1] // 2
    xd = matmul_dtype
    h = jnp.dot(x.reshape(-1, C).astype(xd), w1.astype(xd),
                preferred_element_type=jnp.float32) + b1.astype(jnp.float32)
    val, gate = h[:, :H], h[:, H:]
    a = jax.nn.silu(gate) * val
    out = jnp.dot(a.astype(xd), w2.astype(xd),
                  preferred_element_type=jnp.float32) + b2.astype(jnp.float32)
    return out.reshape(B, T, C).astype(x.dtype)


def _make_params(key, C):
    H = 4 * C
    k1, kb1, k2, kb2 = jax.random.split(key, 4)
    lim1 = 1.0 / (C ** 0.5)
    w1 = jax.random.uniform(k1, (C, 2 * H), jnp.float32, -lim1, lim1)
    b1 = jax.random.uniform(kb1, (2 * H,), jnp.float32, -lim1, lim1)
    lim2 = 1.0 / (H ** 0.5)
    w2 = jax.random.uniform(k2, (H, C), jnp.float32, -lim2, lim2)
    b2 = jax.random.uniform(kb2, (C,), jnp.float32, -lim2, lim2)
    return w1, b1, w2, b2


if __name__ == "__main__":
    key = jax.random.PRNGKey(0)

    # --- config 1: small canonical shape (single H chunk fast path) ----------
    B, T, C = 2, 8, 32
    kx, kp = jax.random.split(key)
    x = jax.random.normal(kx, (B, T, C), dtype=jnp.float32)
    w1, b1, w2, b2 = _make_params(kp, C)

    y = jax.block_until_ready(mlp_forward(x, w1, b1, w2, b2))
    y_ref = reference_forward(x, w1, b1, w2, b2)
    assert y.shape == (B, T, C)
    assert jnp.allclose(y, y_ref, atol=5e-3, rtol=5e-3), "mismatch (config 1)"

    # --- config 2: exercises row padding + multi-chunk H reduction path ------
    B2, T2, C2 = 2, 20, 64          # M=40 (padded), H=256 with th=128 -> 2 chunks
    kx2, kp2 = jax.random.split(kp)
    x2 = jax.random.normal(kx2, (B2, T2, C2), dtype=jnp.float32)
    w1b, b1b, w2b, b2b = _make_params(kp2, C2)

    y2 = jax.block_until_ready(mlp_forward(x2, w1b, b1b, w2b, b2b, tm=16, th=128))
    y2_ref = reference_forward(x2, w1b, b1b, w2b, b2b)
    assert y2.shape == (B2, T2, C2)
    assert jnp.allclose(y2, y2_ref, atol=5e-3, rtol=5e-3), "mismatch (config 2)"

    # TODO(synk): soft-experts branch (use_soft_experts=True) and train-mode
    # dropout RNG are not implemented; this kernel covers the dense SwiGLU MLP.
    print("KERNEL_OK")
</pallas_src>

<mosaic_0001>
module attributes {stable_mosaic.version = 11 : i64} {
  func.func @_mlp_kernel_single(%arg0: i32, %arg1: memref<16x128xbf16, #tpu.memory_space<vmem>>, %arg2: memref<128x256xbf16, #tpu.memory_space<vmem>>, %arg3: memref<1x256xf32, #tpu.memory_space<vmem>>, %arg4: memref<128x128xbf16, #tpu.memory_space<vmem>>, %arg5: memref<1x128xf32, #tpu.memory_space<vmem>>, %arg6: memref<16x128xf32, #tpu.memory_space<vmem>>) attributes {dimension_semantics = [#tpu.dimension_semantics<parallel>], iteration_bounds = array<i64: 1>, scalar_prefetch = 0 : i64, scratch_operands = 0 : i64, tpu.core_type = #tpu.core_type<tc>, window_params = [{transform_indices = @transform_0, window_bounds = array<i64: 16, 128>}, {pipeline_mode = #tpu.pipeline_mode<synchronous>, transform_indices = @transform_1, window_bounds = array<i64: 128, 256>}, {pipeline_mode = #tpu.pipeline_mode<synchronous>, transform_indices = @transform_2, window_bounds = array<i64: 1, 256>}, {pipeline_mode = #tpu.pipeline_mode<synchronous>, transform_indices = @transform_3, window_bounds = array<i64: 128, 128>}, {pipeline_mode = #tpu.pipeline_mode<synchronous>, transform_indices = @transform_4, window_bounds = array<i64: 1, 128>}, {transform_indices = @transform_5, window_bounds = array<i64: 16, 128>}]} {
    %c0 = arith.constant 0 : index
    %c0_0 = arith.constant 0 : index
    %0 = vector.load %arg1[%c0, %c0_0] : memref<16x128xbf16, #tpu.memory_space<vmem>>, vector<16x128xbf16>
    %c0_1 = arith.constant 0 : index
    %c0_2 = arith.constant 0 : index
    %1 = vector.load %arg2[%c0_1, %c0_2] : memref<128x256xbf16, #tpu.memory_space<vmem>>, vector<128x256xbf16>
    %cst = arith.constant dense<0.000000e+00> : vector<16x256xf32>
    %2 = tpu.matmul %0, %1, %cst {dimension_numbers = #tpu.dot_dimension_numbers<[1], [0], [0], [1], [0, 0, 1, 1], [], []>} : vector<16x128xbf16>, vector<128x256xbf16>, vector<16x256xf32> -> vector<16x256xf32>
    %c0_3 = arith.constant 0 : index
    %c0_4 = arith.constant 0 : index
    %3 = vector.load %arg3[%c0_3, %c0_4] : memref<1x256xf32, #tpu.memory_space<vmem>>, vector<1x256xf32>
    %4 = vector.broadcast %3 : vector<1x256xf32> to vector<16x256xf32>
    %5 = arith.addf %2, %4 : vector<16x256xf32>
    %6 = vector.extract_strided_slice %5 {offsets = [0, 0], sizes = [16, 128], strides = [1, 1]} : vector<16x256xf32> to vector<16x128xf32>
    %7 = vector.extract_strided_slice %5 {offsets = [0, 128], sizes = [16, 128], strides = [1, 1]} : vector<16x256xf32> to vector<16x128xf32>
    %8 = arith.negf %7 : vector<16x128xf32>
    %9 = math.exp %8 : vector<16x128xf32>
    %cst_5 = arith.constant 1.000000e+00 : f32
    %10 = vector.broadcast %cst_5 : f32 to vector<16x128xf32>
    %11 = arith.addf %10, %9 : vector<16x128xf32>
    %12 = arith.divf %10, %11 : vector<16x128xf32>
    %13 = arith.mulf %7, %12 : vector<16x128xf32>
    %14 = arith.mulf %6, %13 : vector<16x128xf32>
    %15 = arith.truncf %14 : vector<16x128xf32> to vector<16x128xbf16>
    %c0_6 = arith.constant 0 : index
    %c0_7 = arith.constant 0 : index
    %16 = vector.load %arg4[%c0_6, %c0_7] : memref<128x128xbf16, #tpu.memory_space<vmem>>, vector<128x128xbf16>
    %cst_8 = arith.constant dense<0.000000e+00> : vector<16x128xf32>
    %17 = tpu.matmul %15, %16, %cst_8 {dimension_numbers = #tpu.dot_dimension_numbers<[1], [0], [0], [1], [0, 0, 1, 1], [], []>} : vector<16x128xbf16>, vector<128x128xbf16>, vector<16x128xf32> -> vector<16x128xf32>
    %c0_9 = arith.constant 0 : index
    %c0_10 = arith.constant 0 : index
    %18 = vector.load %arg5[%c0_9, %c0_10] : memref<1x128xf32, #tpu.memory_space<vmem>>, vector<1x128xf32>
    %19 = vector.broadcast %18 : vector<1x128xf32> to vector<16x128xf32>
    %20 = arith.addf %17, %19 : vector<16x128xf32>
    %c0_11 = arith.constant 0 : index
    %c0_12 = arith.constant 0 : index
    %21 = vector.load %arg6[%c0_11, %c0_12] : memref<16x128xf32, #tpu.memory_space<vmem>>, vector<16x128xf32>
    tpu.vector_store %arg6[%c0_11, %c0_12], %20 {strides = array<i32>} : memref<16x128xf32, #tpu.memory_space<vmem>>, vector<16x128xf32>,
    return
  }
  func.func @transform_0(%arg0: i32) -> (i32, i32) {
    %c0_i32 = arith.constant 0 : i32
    %c0_i32_0 = arith.constant 0 : i32
    return %arg0, %c0_i32 : i32, i32
  }
  func.func @transform_1(%arg0: i32) -> (i32, i32) {
    %c0_i32 = arith.constant 0 : i32
    %c0_i32_0 = arith.constant 0 : i32
    %c0_i32_1 = arith.constant 0 : i32
    return %c0_i32, %c0_i32_0 : i32, i32
  }
  func.func @transform_2(%arg0: i32) -> (i32, i32) {
    %c0_i32 = arith.constant 0 : i32
    %c0_i32_0 = arith.constant 0 : i32
    %c0_i32_1 = arith.constant 0 : i32
    return %c0_i32, %c0_i32_0 : i32, i32
  }
  func.func @transform_3(%arg0: i32) -> (i32, i32) {
    %c0_i32 = arith.constant 0 : i32
    %c0_i32_0 = arith.constant 0 : i32
    %c0_i32_1 = arith.constant 0 : i32
    return %c0_i32, %c0_i32_0 : i32, i32
  }
  func.func @transform_4(%arg0: i32) -> (i32, i32) {
    %c0_i32 = arith.constant 0 : i32
    %c0_i32_0 = arith.constant 0 : i32
    %c0_i32_1 = arith.constant 0 : i32
    return %c0_i32, %c0_i32_0 : i32, i32
  }
  func.func @transform_5(%arg0: i32) -> (i32, i32) {
    %c0_i32 = arith.constant 0 : i32
    %c0_i32_0 = arith.constant 0 : i32
    return %arg0, %c0_i32 : i32, i32
  }
}

</mosaic_0001>

<llo_original>
// kernel: mlp_forward.1
$region0: #{mlp_forward.1}
  #allocation0 [shape = 'u32[]', space=smem, size = 0x4, offset = 0x4, fixed_abs, tag = 'smem constant byte address 0x4 - core index']
  #allocation1 [shape = 'u32[144,128]{1,0:T(1,128)}', space=vmem, size = 0x12000, scoped, tag = 'internal scratch']
  %s0 = inlined_call_operand.vmem [shape: bf16[16,128], index: 0, kind: input, shape index: {}]
  %s1 = inlined_call_operand.vmem [shape: bf16[128,256], index: 1, kind: input, shape index: {}]
  %s2 = inlined_call_operand.vmem [shape: f32[1,256], index: 2, kind: input, shape index: {}]
  %s3 = inlined_call_operand.vmem [shape: bf16[128,128], index: 3, kind: input, shape index: {}]
  %s4 = inlined_call_operand.vmem [shape: f32[1,128], index: 4, kind: input, shape index: {}]
  %s5 = inlined_call_operand.vmem [shape: f32[16,128], index: 5, kind: output, shape index: {}]
  %s6 = sld [smem:[#allocation0]]
  $region30: #{mlp_forward.1} parent=0
    _
  %s8 = ssub.s32 1, %s6
  %s9 = scalar_select 0, %s8, %s6
  // Predicated region
  $region2: #{mlp_forward.1} parent=0 // pred_check
    _
  $region3: #{mlp_forward.1} parent=0 // pred_check_branch
    %11 = sbr.rel (0) target = $region5
  $region4: #{mlp_forward.1} parent=0 // pred_region
    _
  $region5: #{mlp_forward.1} parent=0 // pred_fallthru
    _
  // Predicated region
  $region6: #{mlp_forward.1} parent=0 // pred_check
    _
  $region7: #{mlp_forward.1} parent=0 // pred_check_branch
    %13 = sbr.rel (0) target = $region9
  $region8: #{mlp_forward.1} parent=0 // pred_region
    _
  $region9: #{mlp_forward.1} parent=0 // pred_fallthru
    _
  // Predicated region
  $region10: #{mlp_forward.1} parent=0 // pred_check
    _
  $region11: #{mlp_forward.1} parent=0 // pred_check_branch
    %15 = sbr.rel (0) target = $region13
  $region12: #{mlp_forward.1} parent=0 // pred_region
    _
  $region13: #{mlp_forward.1} parent=0 // pred_fallthru
    _
  // Predicated region
  $region14: #{mlp_forward.1} parent=0 // pred_check
    _
  $region15: #{mlp_forward.1} parent=0 // pred_check_branch
    %17 = sbr.rel (0) target = $region17
  $region16: #{mlp_forward.1} parent=0 // pred_region
    _
  $region17: #{mlp_forward.1} parent=0 // pred_fallthru
    _
  // Predicated region
  $region18: #{mlp_forward.1} parent=0 // pred_check
    _
  $region19: #{mlp_forward.1} parent=0 // pred_check_branch
    %19 = sbr.rel (0) target = $region21
  $region20: #{mlp_forward.1} parent=0 // pred_region
    _
  $region21: #{mlp_forward.1} parent=0 // pred_fallthru
    _
  %v21 = vld [vmem:[%s0] sm:$0xf]
  %v22 = vld [vmem:[%s0 + $0x4] sm:$0xf]
  %v23 = vld [vmem:[%s1] sm:$0xff]
  %v24 = vld [vmem:[%s1 + $0x8] sm:$0xff]
  %v25 = vld [vmem:[%s1 + $0x10] sm:$0xff]
  %v26 = vld [vmem:[%s1 + $0x18] sm:$0xff]
  %v27 = vld [vmem:[%s1 + $0x20] sm:$0xff]
  %v28 = vld [vmem:[%s1 + $0x28] sm:$0xff]
  %v29 = vld [vmem:[%s1 + $0x30] sm:$0xff]
  %v30 = vld [vmem:[%s1 + $0x38] sm:$0xff]
  %v31 = vld [vmem:[%s1 + $0x40] sm:$0xff]
  %v32 = vld [vmem:[%s1 + $0x48] sm:$0xff]
  %v33 = vld [vmem:[%s1 + $0x50] sm:$0xff]
  %v34 = vld [vmem:[%s1 + $0x58] sm:$0xff]
  %v35 = vld [vmem:[%s1 + $0x60] sm:$0xff]
  %v36 = vld [vmem:[%s1 + $0x68] sm:$0xff]
  %v37 = vld [vmem:[%s1 + $0x70] sm:$0xff]
  %v38 = vld [vmem:[%s1 + $0x78] sm:$0xff]
  %v39 = vld [vmem:[%s2] sm:$0x3]
  %v41 = vlaneseq
  %v42 = vshrl.u32 %v41, 7
  %v43 = vsub.s32 0, %v42
  %v44 = vrot.slane %v39, %v43
  %v45 = vlaneseq
  %v46 = vshrl.u32 %v45, 7
  %v47 = vsub.s32 1, %v46
  %v48 = vrot.slane %v39, %v47
  %v53 = vunpack.c.l.b16 %v21
  %v54 = vunpack.c.l.b16 %v22
  %v55 = vpack.c.b16 %v54, %v53
  %v73 = vunpack.c.l.b16 %v23
  %v74 = vunpack.c.h.b16 %v23
  %v75 = vunpack.c.l.b16 %v24
  %v76 = vunpack.c.h.b16 %v24
  %v77 = vunpack.c.l.b16 %v25
  %v78 = vunpack.c.h.b16 %v25
  %v79 = vunpack.c.l.b16 %v26
  %v80 = vunpack.c.h.b16 %v26
  %v81 = vunpack.c.l.b16 %v27
  %v82 = vunpack.c.h.b16 %v27
  %v83 = vunpack.c.l.b16 %v28
  %v84 = vunpack.c.h.b16 %v28
  %v85 = vunpack.c.l.b16 %v29
  %v86 = vunpack.c.h.b16 %v29
  %v87 = vunpack.c.l.b16 %v30
  %v88 = vunpack.c.h.b16 %v30
  %v89 = vunpack.c.l.b16 %v31
  %v90 = vunpack.c.h.b16 %v31
  %v91 = vunpack.c.l.b16 %v32
  %v92 = vunpack.c.h.b16 %v32
  %v93 = vunpack.c.l.b16 %v33
  %v94 = vunpack.c.h.b16 %v33
  %v95 = vunpack.c.l.b16 %v34
  %v96 = vunpack.c.h.b16 %v34
  %v97 = vunpack.c.l.b16 %v35
  %v98 = vunpack.c.h.b16 %v35
  %v99 = vunpack.c.l.b16 %v36
  %v100 = vunpack.c.h.b16 %v36
  %v101 = vunpack.c.l.b16 %v37
  %v102 = vunpack.c.h.b16 %v37
  %v103 = vunpack.c.l.b16 %v38
  %v104 = vunpack.c.h.b16 %v38
  %v105 = vpack.c.b16 %v75, %v73
  %v106 = vpack.c.b16 %v76, %v74
  %v107 = vpack.c.b16 %v79, %v77
  %v108 = vpack.c.b16 %v80, %v78
  %v109 = vpack.c.b16 %v83, %v81
  %v110 = vpack.c.b16 %v84, %v82
  %v111 = vpack.c.b16 %v87, %v85
  %v112 = vpack.c.b16 %v88, %v86
  %v113 = vpack.c.b16 %v91, %v89
  %v114 = vpack.c.b16 %v92, %v90
  %v115 = vpack.c.b16 %v95, %v93
  %v116 = vpack.c.b16 %v96, %v94
  %v117 = vpack.c.b16 %v99, %v97
  %v118 = vpack.c.b16 %v100, %v98
  %v119 = vpack.c.b16 %v103, %v101
  %v120 = vpack.c.b16 %v104, %v102
  %137 = vmatprep.subr.bf16.mxu0 %v106
  %138 = vmatpush1.bf16.msra.mxu0 %v105
  %139 = vmatprep.subr.bf16.mxu0 %v108
  %140 = vmatpush1.bf16.msra.mxu0 %v107
  %141 = vmatprep.subr.bf16.mxu0 %v110
  %142 = vmatpush1.bf16.msra.mxu0 %v109
  %143 = vmatprep.subr.bf16.mxu0 %v112
  %144 = vmatpush1.bf16.msra.mxu0 %v111
  %145 = vmatprep.subr.bf16.mxu0 %v114
  %146 = vmatpush1.bf16.msra.mxu0 %v113
  %147 = vmatprep.subr.bf16.mxu0 %v116
  %148 = vmatpush1.bf16.msra.mxu0 %v115
  %149 = vmatprep.subr.bf16.mxu0 %v118
  %150 = vmatpush1.bf16.msra.mxu0 %v117
  %151 = vmatprep.subr.bf16.mxu0 %v120
  %152 = vmatpush1.bf16.msra.mxu0 %v119
  %153 = vmatprep.subr.bf16.mxu0 0
  %154 = vmatpush1.bf16.msra.mxu0 0
  %155 = vmatprep.subr.bf16.mxu0 0
  %156 = vmatpush1.bf16.msra.mxu0 0
  %157 = vmatprep.subr.bf16.mxu0 0
  %158 = vmatpush1.bf16.msra.mxu0 0
  %159 = vmatprep.subr.bf16.mxu0 0
  %160 = vmatpush1.bf16.msra.mxu0 0
  %161 = vmatprep.subr.bf16.mxu0 0
  %162 = vmatpush1.bf16.msra.mxu0 0
  %163 = vmatprep.subr.bf16.mxu0 0
  %164 = vmatpush1.bf16.msra.mxu0 0
  %165 = vmatprep.subr.bf16.mxu0 0
  %166 = vmatpush1.bf16.msra.mxu0 0
  %167 = vmatprep.subr.bf16.mxu0 0
  %168 = vmatpush1.bf16.msra.mxu0 0
  %169 = vmatprep.mubr.bf16.mxu0 0
  %170 = vmatmul.mubr.bf16.gmra.mrb[0].mxu0 %v55
  %v171 = vpop.f32.mrb[0].mxu0
  %v172 = vadd.f32 %v44, %v171
  %v173 = vpop.f32.mrb[0].mxu0
  %v174 = vadd.f32 %v48, %v173
  %v175 = vpop.f32.mrb[0].mxu0
  %v176 = vadd.f32 %v44, %v175
  %v177 = vpop.f32.mrb[0].mxu0
  %v178 = vadd.f32 %v48, %v177
  %179 = vdwg.mxu0
  %v180 = vxor.u32 %v174, 2147483648
  %v181 = vxor.u32 %v178, 2147483648
  %v182 = vmul.f32 %v180, 1.442695
  %v183 = vpow.pop %v182
  %v184 = vmul.f32 %v181, 1.442695
  %v185 = vpow.pop %v184
  %v186 = vadd.f32 %v183, 1.0
  %v187 = vadd.f32 %v185, 1.0
  %v188 = vrcp.pop %v186
  %v189 = vmul.f32 1.0, %v188
  %v190 = vrcp.pop %v187
  %v191 = vmul.f32 1.0, %v190
  %v192 = vmul.f32 %v174, %v189
  %v193 = vmul.f32 %v178, %v191
  %v194 = vmul.f32 %v172, %v192
  %v195 = vmul.f32 %v176, %v193
  %v196 = vpack.c.bf16 %v195, %v194
  %v197 = vld [vmem:[%s3] sm:$0xf]
  %v198 = vld [vmem:[%s3 + $0x4] sm:$0xf]
  %v199 = vld [vmem:[%s3 + $0x8] sm:$0xf]
  %v200 = vld [vmem:[%s3 + $0xc] sm:$0xf]
  %v201 = vld [vmem:[%s3 + $0x10] sm:$0xf]
  %v202 = vld [vmem:[%s3 + $0x14] sm:$0xf]
  %v203 = vld [vmem:[%s3 + $0x18] sm:$0xf]
  %v204 = vld [vmem:[%s3 + $0x1c] sm:$0xf]
  %v205 = vld [vmem:[%s3 + $0x20] sm:$0xf]
  %v206 = vld [vmem:[%s3 + $0x24] sm:$0xf]
  %v207 = vld [vmem:[%s3 + $0x28] sm:$0xf]
  %v208 = vld [vmem:[%s3 + $0x2c] sm:$0xf]
  %v209 = vld [vmem:[%s3 + $0x30] sm:$0xf]
  %v210 = vld [vmem:[%s3 + $0x34] sm:$0xf]
  %v211 = vld [vmem:[%s3 + $0x38] sm:$0xf]
  %v212 = vld [vmem:[%s3 + $0x3c] sm:$0xf]
  %v213 = vld [vmem:[%s4] sm:$0x1]
  %v215 = vlaneseq
  %v216 = vshrl.u32 %v215, 7
  %v217 = vsub.s32 0, %v216
  %v218 = vrot.slane %v213, %v217
  %v236 = vunpack.c.l.b16 %v197
  %v237 = vunpack.c.l.b16 %v198
  %v238 = vunpack.c.l.b16 %v199
  %v239 = vunpack.c.l.b16 %v200
  %v240 = vunpack.c.l.b16 %v201
  %v241 = vunpack.c.l.b16 %v202
  %v242 = vunpack.c.l.b16 %v203
  %v243 = vunpack.c.l.b16 %v204
  %v244 = vunpack.c.l.b16 %v205
  %v245 = vunpack.c.l.b16 %v206
  %v246 = vunpack.c.l.b16 %v207
  %v247 = vunpack.c.l.b16 %v208
  %v248 = vunpack.c.l.b16 %v209
  %v249 = vunpack.c.l.b16 %v210
  %v250 = vunpack.c.l.b16 %v211
  %v251 = vunpack.c.l.b16 %v212
  %v252 = vpack.c.b16 %v237, %v236
  %v253 = vpack.c.b16 %v239, %v238
  %v254 = vpack.c.b16 %v241, %v240
  %v255 = vpack.c.b16 %v243, %v242
  %v256 = vpack.c.b16 %v245, %v244
  %v257 = vpack.c.b16 %v247, %v246
  %v258 = vpack.c.b16 %v249, %v248
  %v259 = vpack.c.b16 %v251, %v250
  %268 = vmatprep.subr.bf16.mxu0 0
  %269 = vmatpush1.bf16.msra.mxu0 %v252
  %270 = vmatprep.subr.bf16.mxu0 0
  %271 = vmatpush1.bf16.msra.mxu0 %v253
  %272 = vmatprep.subr.bf16.mxu0 0
  %273 = vmatpush1.bf16.msra.mxu0 %v254
  %274 = vmatprep.subr.bf16.mxu0 0
  %275 = vmatpush1.bf16.msra.mxu0 %v255
  %276 = vmatprep.subr.bf16.mxu0 0
  %277 = vmatpush1.bf16.msra.mxu0 %v256
  %278 = vmatprep.subr.bf16.mxu0 0
  %279 = vmatpush1.bf16.msra.mxu0 %v257
  %280 = vmatprep.subr.bf16.mxu0 0
  %281 = vmatpush1.bf16.msra.mxu0 %v258
  %282 = vmatprep.subr.bf16.mxu0 0
  %283 = vmatpush1.bf16.msra.mxu0 %v259
  %284 = vmatprep.subr.bf16.mxu0 0
  %285 = vmatpush1.bf16.msra.mxu0 0
  %286 = vmatprep.subr.bf16.mxu0 0
  %287 = vmatpush1.bf16.msra.mxu0 0
  %288 = vmatprep.subr.bf16.mxu0 0
  %289 = vmatpush1.bf16.msra.mxu0 0
  %290 = vmatprep.subr.bf16.mxu0 0
  %291 = vmatpush1.bf16.msra.mxu0 0
  %292 = vmatprep.subr.bf16.mxu0 0
  %293 = vmatpush1.bf16.msra.mxu0 0
  %294 = vmatprep.subr.bf16.mxu0 0
  %295 = vmatpush1.bf16.msra.mxu0 0
  %296 = vmatprep.subr.bf16.mxu0 0
  %297 = vmatpush1.bf16.msra.mxu0 0
  %298 = vmatprep.subr.bf16.mxu0 0
  %299 = vmatpush1.bf16.msra.mxu0 0
  %300 = vmatprep.mubr.bf16.mxu0 0
  %301 = vmatmul.mubr.bf16.gmra.mrb[0].mxu0 %v196
  %v302 = vpop.f32.mrb[0].mxu0
  %v303 = vadd.f32 %v218, %v302
  %v304 = vpop.f32.mrb[0].mxu0
  %v305 = vpop.f32.mrb[0].mxu0
  %v306 = vadd.f32 %v218, %v305
  %v307 = vpop.f32.mrb[0].mxu0
  %308 = vdwg.mxu0
  %309 = vst [vmem:[%s5] sm:$0xff] %v303
  %310 = vst [vmem:[%s5 + $0x8] sm:$0xff] %v306
  // Predicated region
  $region22: #{mlp_forward.1} parent=0 // pred_check
    _
  $region23: #{mlp_forward.1} parent=0 // pred_check_branch
    %312 = sbr.rel (0) target = $region25
  $region24: #{mlp_forward.1} parent=0 // pred_region
    _
  $region25: #{mlp_forward.1} parent=0 // pred_fallthru
    _
  // Predicated region
  $region26: #{mlp_forward.1} parent=0 // pred_check
    _
  $region27: #{mlp_forward.1} parent=0 // pred_check_branch
    %314 = sbr.rel (0) target = $region29
  $region28: #{mlp_forward.1} parent=0 // pred_region
    _
  $region29: #{mlp_forward.1} parent=0 // pred_fallthru
    _

</llo_original>
